<compile_context>
chip_gen: v7x
topology: tpu7x:2x2x1
jax: 0.10.0
libtpu: 0.0.40
codegen_flags: <defaults>
</compile_context>

<pallas_src>
import math

import jax
import jax.numpy as jnp
from jax.experimental import pallas as pl
from jax.experimental.pallas import tpu as pltpu


def _round_up(x: int, m: int) -> int:
    return ((x + m - 1) // m) * m


def _round_down(x: int, m: int) -> int:
    return (x // m) * m


def _make_kernel(scale: float):
    inv_scale = 1.0 / scale
    logp_const = math.log(scale) + 0.5 * math.log(2.0 * math.pi)

    def kernel(mean_ref, action_ref, noise_ref, sample_ref, logp_ref):
        mean = mean_ref[...].astype(jnp.float32)
        noise = noise_ref[...].astype(jnp.float32)
        action = action_ref[...].astype(jnp.float32)

        # Reparameterized sample: mean + scale * eps.
        sample_ref[...] = (mean + jnp.float32(scale) * noise).astype(sample_ref.dtype)

        # Per-element Normal log-pdf; Independent(..., 1) sums over last dim.
        z = (action - mean) * jnp.float32(inv_scale)
        elem_logp = -0.5 * (z * z) - jnp.float32(logp_const)
        logp_ref[...] = jnp.sum(elem_logp, axis=-1, keepdims=True)

    return kernel


# ~1 MiB input blocks: big enough to amortize the ~0.35 us per-grid-step cost
# and sit near the HBM roofline; small enough to never pressure VMEM.
_TARGET_BLOCK_BYTES = 1 << 20
# Conservative double-buffered footprint budget (v7x has only 64 MiB physical VMEM).
_VMEM_BUDGET_BYTES = 40 << 20


def gaussian_head_fixed_cov(mean, action, noise, scale=1.0, block_rows=None):
    """Runs the Pallas kernel. mean/action/noise: (B, D), f32 or bf16.

    Returns (sample (B, D) in input dtype, log_prob (B,) f32, entropy (B,) f32).
    """
    if not scale > 0:
        raise ValueError(f"scale must be > 0, got {scale}")

    B, D = mean.shape
    itemsize = jnp.dtype(mean.dtype).itemsize
    sublane = max(8, 32 // itemsize)  # 8 for f32, 16 for bf16

    # VMEM bytes per tile row across all pipelined streams, double-buffered:
    # 3 inputs + 1 sample output of D elems, plus the 4-byte logp column.
    row_bytes = 2 * ((3 + 1) * D * itemsize + 4)

    if block_rows is not None:
        tb = _round_up(int(block_rows), sublane)
    else:
        tb = _round_up(max(_TARGET_BLOCK_BYTES // (D * itemsize), 1), sublane)
    # Keep the double-buffered footprint within the portable VMEM budget.
    tb = min(tb, max(_round_down(_VMEM_BUDGET_BYTES // row_bytes, sublane), sublane))
    # Never let the block exceed the array extent (edge block may still be ragged).
    if B <= sublane:
        tb = B  # single block equal to the full array: always a legal block shape
    else:
        tb = min(tb, _round_down(B, sublane))
    tb = max(tb, 1)

    num_tiles = pl.cdiv(B, tb)
    kernel = _make_kernel(float(scale))

    # ~5 VPU ops/elem; 3 input + 1 output streams of (B, D) + a (B, 1) f32 logp stream.
    cost = pl.CostEstimate(
        flops=5 * B * D,
        transcendentals=0,
        bytes_accessed=(3 + 1) * B * D * itemsize + B * 4,
    )

    vmem_limit = min(48 << 20, max(16 << 20, tb * row_bytes + (2 << 20)))

    sample, logp = pl.pallas_call(
        kernel,
        out_shape=(
            jax.ShapeDtypeStruct((B, D), mean.dtype),
            jax.ShapeDtypeStruct((B, 1), jnp.float32),
        ),
        grid_spec=pl.GridSpec(
            grid=(num_tiles,),
            in_specs=[
                pl.BlockSpec((tb, D), lambda i: (i, 0)),
                pl.BlockSpec((tb, D), lambda i: (i, 0)),
                pl.BlockSpec((tb, D), lambda i: (i, 0)),
            ],
            out_specs=(
                pl.BlockSpec((tb, D), lambda i: (i, 0)),
                pl.BlockSpec((tb, 1), lambda i: (i, 0)),
            ),
        ),
        compiler_params=pltpu.CompilerParams(
            dimension_semantics=("parallel",),
            vmem_limit_bytes=vmem_limit,
        ),
        cost_estimate=cost,
    )(mean, action, noise)

    # Entropy of Independent(Normal(., scale), 1) is a compile-time constant.
    entropy_const = D * (0.5 + 0.5 * math.log(2.0 * math.pi) + math.log(float(scale)))
    ent = jnp.full((B,), entropy_const, dtype=jnp.float32)

    # (B, 1) -> (B,) is a free reshape (no extra HBM pass).
    return sample, logp[:, 0], ent


if __name__ == "__main__":
    B, D = 20, 32          # batch of mean vectors (not a multiple of 8), action dim
    scale = 0.5

    key = jax.random.PRNGKey(0)
    k_mean, k_act, k_noise = jax.random.split(key, 3)
    mean = jax.random.normal(k_mean, (B, D), dtype=jnp.float32)
    action = jax.random.normal(k_act, (B, D), dtype=jnp.float32)
    noise = jax.random.normal(k_noise, (B, D), dtype=jnp.float32)

    # Default D-aware tiling at this size gives TB=16 -> 2 tiles with a ragged
    # (4-row) edge block: exercises multi-tile pipelining + OOB write masking.
    sample, logp, ent = gaussian_head_fixed_cov(mean, action, noise, scale=scale)
    jax.block_until_ready((sample, logp, ent))

    # Reference (pure JAX) check of Independent(Normal(mean, scale), 1) semantics.
    ref_sample = mean + scale * noise
    ref_elem = (-0.5 * ((action - mean) / scale) ** 2
                - jnp.log(scale) - 0.5 * jnp.log(2.0 * jnp.pi))
    ref_logp = jnp.sum(ref_elem, axis=-1)
    ref_ent = jnp.full((B,), D * (0.5 + 0.5 * jnp.log(2.0 * jnp.pi) + jnp.log(scale)),
                       dtype=jnp.float32)

    assert sample.shape == (B, D) and logp.shape == (B,) and ent.shape == (B,)
    assert jnp.allclose(sample, ref_sample, atol=1e-5)
    assert jnp.allclose(logp, ref_logp, atol=1e-4)
    assert jnp.allclose(ent, ref_ent, atol=1e-4)

    print("KERNEL_OK")
</pallas_src>

<mosaic_0001>
module attributes {stable_mosaic.version = 11 : i64} {
  func.func @kernel(%arg0: i32, %arg1: memref<16x32xf32, #tpu.memory_space<vmem>>, %arg2: memref<16x32xf32, #tpu.memory_space<vmem>>, %arg3: memref<16x32xf32, #tpu.memory_space<vmem>>, %arg4: memref<16x32xf32, #tpu.memory_space<vmem>>, %arg5: memref<16x1xf32, #tpu.memory_space<vmem>>) attributes {dimension_semantics = [#tpu.dimension_semantics<parallel>], iteration_bounds = array<i64: 2>, scalar_prefetch = 0 : i64, scratch_operands = 0 : i64, tpu.core_type = #tpu.core_type<tc>, window_params = [{transform_indices = @transform_0, window_bounds = array<i64: 16, 32>}, {transform_indices = @transform_1, window_bounds = array<i64: 16, 32>}, {transform_indices = @transform_2, window_bounds = array<i64: 16, 32>}, {transform_indices = @transform_3, window_bounds = array<i64: 16, 32>}, {transform_indices = @transform_4, window_bounds = array<i64: 16, 1>}]} {
    %c0 = arith.constant 0 : index
    %c0_0 = arith.constant 0 : index
    %0 = vector.load %arg1[%c0, %c0_0] : memref<16x32xf32, #tpu.memory_space<vmem>>, vector<16x32xf32>
    %c0_1 = arith.constant 0 : index
    %c0_2 = arith.constant 0 : index
    %1 = vector.load %arg3[%c0_1, %c0_2] : memref<16x32xf32, #tpu.memory_space<vmem>>, vector<16x32xf32>
    %c0_3 = arith.constant 0 : index
    %c0_4 = arith.constant 0 : index
    %2 = vector.load %arg2[%c0_3, %c0_4] : memref<16x32xf32, #tpu.memory_space<vmem>>, vector<16x32xf32>
    %cst = arith.constant 5.000000e-01 : f32
    %3 = vector.broadcast %cst : f32 to vector<16x32xf32>
    %4 = arith.mulf %3, %1 : vector<16x32xf32>
    %5 = arith.addf %0, %4 : vector<16x32xf32>
    %c0_5 = arith.constant 0 : index
    %c0_6 = arith.constant 0 : index
    %6 = vector.load %arg4[%c0_5, %c0_6] : memref<16x32xf32, #tpu.memory_space<vmem>>, vector<16x32xf32>
    tpu.vector_store %arg4[%c0_5, %c0_6], %5 {strides = array<i32>} : memref<16x32xf32, #tpu.memory_space<vmem>>, vector<16x32xf32>,
    %7 = arith.subf %2, %0 : vector<16x32xf32>
    %cst_7 = arith.constant 2.000000e+00 : f32
    %8 = vector.broadcast %cst_7 : f32 to vector<16x32xf32>
    %9 = arith.mulf %7, %8 : vector<16x32xf32>
    %10 = arith.mulf %9, %9 : vector<16x32xf32>
    %cst_8 = arith.constant -5.000000e-01 : f32
    %11 = vector.broadcast %cst_8 : f32 to vector<16x32xf32>
    %12 = arith.mulf %11, %10 : vector<16x32xf32>
    %cst_9 = arith.constant 0.22579135 : f32
    %13 = vector.broadcast %cst_9 : f32 to vector<16x32xf32>
    %14 = arith.subf %12, %13 : vector<16x32xf32>
    %cst_10 = arith.constant dense<0.000000e+00> : vector<16xf32>
    %15 = vector.multi_reduction <add>, %14, %cst_10 [1] : vector<16x32xf32> to vector<16xf32>
    %16 = vector.shape_cast %15 : vector<16xf32> to vector<16x1xf32>
    %c0_11 = arith.constant 0 : index
    %c0_12 = arith.constant 0 : index
    %17 = vector.load %arg5[%c0_11, %c0_12] : memref<16x1xf32, #tpu.memory_space<vmem>>, vector<16x1xf32>
    tpu.vector_store %arg5[%c0_11, %c0_12], %16 {strides = array<i32>} : memref<16x1xf32, #tpu.memory_space<vmem>>, vector<16x1xf32>,
    return
  }
  func.func @transform_0(%arg0: i32) -> (i32, i32) {
    %c0_i32 = arith.constant 0 : i32
    %c0_i32_0 = arith.constant 0 : i32
    return %arg0, %c0_i32 : i32, i32
  }
  func.func @transform_1(%arg0: i32) -> (i32, i32) {
    %c0_i32 = arith.constant 0 : i32
    %c0_i32_0 = arith.constant 0 : i32
    return %arg0, %c0_i32 : i32, i32
  }
  func.func @transform_2(%arg0: i32) -> (i32, i32) {
    %c0_i32 = arith.constant 0 : i32
    %c0_i32_0 = arith.constant 0 : i32
    return %arg0, %c0_i32 : i32, i32
  }
  func.func @transform_3(%arg0: i32) -> (i32, i32) {
    %c0_i32 = arith.constant 0 : i32
    %c0_i32_0 = arith.constant 0 : i32
    return %arg0, %c0_i32 : i32, i32
  }
  func.func @transform_4(%arg0: i32) -> (i32, i32) {
    %c0_i32 = arith.constant 0 : i32
    %c0_i32_0 = arith.constant 0 : i32
    return %arg0, %c0_i32 : i32, i32
  }
}

</mosaic_0001>

<llo_original>
// kernel: tpu_custom_call.1
$region0: #{tpu_custom_call.1}
  #allocation0 [shape = 'u32[]', space=smem, size = 0x4, offset = 0x4, fixed_abs, tag = 'smem constant byte address 0x4 - core index']
  #allocation1 [shape = 'u32[144,128]{1,0:T(1,128)}', space=vmem, size = 0x12000, scoped, tag = 'internal scratch']
  %s0 = inlined_call_operand.hbm [shape: f32[20,32], index: 0, kind: input, shape index: {}]
  %s1 = inlined_call_operand.hbm [shape: f32[20,32], index: 1, kind: input, shape index: {}]
  %s2 = inlined_call_operand.hbm [shape: f32[20,32], index: 2, kind: input, shape index: {}]
  %s3 = inlined_call_operand.hbm [shape: f32[20,32], index: 3, kind: output, shape index: {0}]
  %s4 = inlined_call_operand.vmem [shape: f32[20,1], index: 4, kind: output, shape index: {1}]
  %5 = xla_tuple %s3, %s4
  %s6 = sld [smem:[#allocation0]]
  $region113: #{tpu_custom_call.1} parent=0
    _
  %s8 = ssub.s32 1, %s6
  %s9 = scalar_select 0, %s8, %s6
  $region1: #{tpu_custom_call.1} parent=0
    #allocation2 [shape = 'u8[16384]{0}', space=vmem, size = 0x4000, scoped, tag = 'input window, operand 0']
    #allocation3 [shape = 's32[2]{0}', space=sflag, size = 0x8, scoped, tag = 'scoped memory for tpu_custom_call.1']
    #allocation4 [shape = 's32[2]{0}', space=sflag, size = 0x8, scoped, tag = 'scoped memory for tpu_custom_call.1']
    #allocation5 [shape = 'u8[16384]{0}', space=vmem, size = 0x4000, scoped, tag = 'input window, operand 1']
    #allocation6 [shape = 's32[2]{0}', space=sflag, size = 0x8, scoped, tag = 'scoped memory for tpu_custom_call.1']
    #allocation7 [shape = 'u8[16384]{0}', space=vmem, size = 0x4000, scoped, tag = 'input window, operand 2']
    #allocation8 [shape = 'u8[16384]{0}', space=vmem, size = 0x4000, scoped, tag = 'output window, operand 0']
    #allocation9 [shape = 'u8[16384]{0}', space=vmem, size = 0x4000, scoped, tag = 'output window, operand 1']
    %10 = vsyncpa [#allocation3], 0
    %s11 = scalar_lea.sflag [#allocation3], 1
    %12 = vsyncpa %s11, 0
    %13 = vsyncpa [#allocation6], 0
    %s14 = scalar_lea.sflag [#allocation6], 1
    %15 = vsyncpa %s14, 0
    %16 = vsyncpa [#allocation4], 0
    %s17 = scalar_lea.sflag [#allocation4], 1
    %18 = vsyncpa %s17, 0
    loop: start=0, step=1, limit=4
    $region2: #{tpu_custom_call.1} parent=1 // loop_pre_header
      _
    $region3: #{tpu_custom_call.1} parent=1 // loop_header
      %s20 = sphi 0, %s24
      %p21 = scmp.ge.s32.totalorder %s20, 4
      %s30 = sphi 0, %s32
      %s33 = sphi 0, %s30
      %s34 = sphi 0, %s33
      %s50 = sphi 0, %s34
      %s56 = sphi 0, %s58
      %s59 = sphi 0, %s56
      %s60 = sphi 0, %s59
      %s76 = sphi 0, %s60
      %s82 = sphi 0, %s84
      %s85 = sphi 0, %s82
      %s86 = sphi 0, %s85
      %s102 = sphi 0, %s86
      %s108 = sphi 0, %s110
      %s111 = sphi 0, %s108
      %s112 = sphi 0, %s111
      %s128 = sphi 0, %s112
      %s134 = sphi 0, %s136
      %s137 = sphi 0, %s134
      %s138 = sphi 0, %s137
      %s154 = sphi 0, %s138
    $region4: #{tpu_custom_call.1} parent=1 // loop_header_branch
      %23 = sbr.rel (%p21) target = $region8
    $region5: #{tpu_custom_call.1} parent=1 // loop_body
      %s25 = ssub.s32 %s20, 1
      %s26 = ssub.s32 %s20, 2
      %s27 = sadd.s32 %s20, 1
      %s28 = ssub.s32 %s20, %s27
      %p29 = scmp.eq.s32.totalorder %s28, 0
      %s31 = sadd.s32 %s30, 1
      %s32 = scalar_select %p29, %s30, %s31
      %p35 = pneg %p29
      %p36 = scmp.eq.s32.totalorder %s20, 1
      %p37 = por %p35, %p36
      %p38 = scmp.ne.s32.totalorder %s30, %s33
      %p39 = scmp.eq.s32.totalorder %s20, 0
      %p40 = por %p38, %p39
      %p41 = scmp.ne.s32.totalorder %s30, %s33
      %p42 = scmp.eq.s32.totalorder %s25, 1
      %p43 = por %p41, %p42
      %p44 = scmp.ne.s32.totalorder %s33, %s34
      %p45 = scmp.eq.s32.totalorder %s25, 0
      %p46 = por %p44, %p45
      %p47 = scmp.ne.s32.totalorder %s33, %s34
      %p48 = scmp.eq.s32.totalorder %s26, 1
      %p49 = por %p47, %p48
      %p51 = scmp.ne.s32.totalorder %s34, %s50
      %p52 = scmp.eq.s32.totalorder %s26, 0
      %p53 = por %p51, %p52
      %s54 = ssub.s32 %s20, %s27
      %p55 = scmp.eq.s32.totalorder %s54, 0
      %s57 = sadd.s32 %s56, 1
      %s58 = scalar_select %p55, %s56, %s57
      %p61 = pneg %p55
      %p62 = scmp.eq.s32.totalorder %s20, 1
      %p63 = por %p61, %p62
      %p64 = scmp.ne.s32.totalorder %s56, %s59
      %p65 = scmp.eq.s32.totalorder %s20, 0
      %p66 = por %p64, %p65
      %p67 = scmp.ne.s32.totalorder %s56, %s59
      %p68 = scmp.eq.s32.totalorder %s25, 1
      %p69 = por %p67, %p68
      %p70 = scmp.ne.s32.totalorder %s59, %s60
      %p71 = scmp.eq.s32.totalorder %s25, 0
      %p72 = por %p70, %p71
      %p73 = scmp.ne.s32.totalorder %s59, %s60
      %p74 = scmp.eq.s32.totalorder %s26, 1
      %p75 = por %p73, %p74
      %p77 = scmp.ne.s32.totalorder %s60, %s76
      %p78 = scmp.eq.s32.totalorder %s26, 0
      %p79 = por %p77, %p78
      %s80 = ssub.s32 %s20, %s27
      %p81 = scmp.eq.s32.totalorder %s80, 0
      %s83 = sadd.s32 %s82, 1
      %s84 = scalar_select %p81, %s82, %s83
      %p87 = pneg %p81
      %p88 = scmp.eq.s32.totalorder %s20, 1
      %p89 = por %p87, %p88
      %p90 = scmp.ne.s32.totalorder %s82, %s85
      %p91 = scmp.eq.s32.totalorder %s20, 0
      %p92 = por %p90, %p91
      %p93 = scmp.ne.s32.totalorder %s82, %s85
      %p94 = scmp.eq.s32.totalorder %s25, 1
      %p95 = por %p93, %p94
      %p96 = scmp.ne.s32.totalorder %s85, %s86
      %p97 = scmp.eq.s32.totalorder %s25, 0
      %p98 = por %p96, %p97
      %p99 = scmp.ne.s32.totalorder %s85, %s86
      %p100 = scmp.eq.s32.totalorder %s26, 1
      %p101 = por %p99, %p100
      %p103 = scmp.ne.s32.totalorder %s86, %s102
      %p104 = scmp.eq.s32.totalorder %s26, 0
      %p105 = por %p103, %p104
      %s106 = ssub.s32 %s20, %s27
      %p107 = scmp.eq.s32.totalorder %s106, 0
      %s109 = sadd.s32 %s108, 1
      %s110 = scalar_select %p107, %s108, %s109
      %p113 = pneg %p107
      %p114 = scmp.eq.s32.totalorder %s20, 1
      %p115 = por %p113, %p114
      %p116 = scmp.ne.s32.totalorder %s108, %s111
      %p117 = scmp.eq.s32.totalorder %s20, 0
      %p118 = por %p116, %p117
      %p119 = scmp.ne.s32.totalorder %s108, %s111
      %p120 = scmp.eq.s32.totalorder %s25, 1
      %p121 = por %p119, %p120
      %p122 = scmp.ne.s32.totalorder %s111, %s112
      %p123 = scmp.eq.s32.totalorder %s25, 0
      %p124 = por %p122, %p123
      %p125 = scmp.ne.s32.totalorder %s111, %s112
      %p126 = scmp.eq.s32.totalorder %s26, 1
      %p127 = por %p125, %p126
      %p129 = scmp.ne.s32.totalorder %s112, %s128
      %p130 = scmp.eq.s32.totalorder %s26, 0
      %p131 = por %p129, %p130
      %s132 = ssub.s32 %s20, %s27
      %p133 = scmp.eq.s32.totalorder %s132, 0
      %s135 = sadd.s32 %s134, 1
      %s136 = scalar_select %p133, %s134, %s135
      %p139 = pneg %p133
      %p140 = scmp.eq.s32.totalorder %s20, 1
      %p141 = por %p139, %p140
      %p142 = scmp.ne.s32.totalorder %s134, %s137
      %p143 = scmp.eq.s32.totalorder %s20, 0
      %p144 = por %p142, %p143
      %p145 = scmp.ne.s32.totalorder %s134, %s137
      %p146 = scmp.eq.s32.totalorder %s25, 1
      %p147 = por %p145, %p146
      %p148 = scmp.ne.s32.totalorder %s137, %s138
      %p149 = scmp.eq.s32.totalorder %s25, 0
      %p150 = por %p148, %p149
      %p151 = scmp.ne.s32.totalorder %s137, %s138
      %p152 = scmp.eq.s32.totalorder %s26, 1
      %p153 = por %p151, %p152
      %p155 = scmp.ne.s32.totalorder %s138, %s154
      %p156 = scmp.eq.s32.totalorder %s26, 0
      %p157 = por %p155, %p156
      %p158 = scmp.le.s32.totalorder 1, %s20
      %p159 = scmp.lt.s32.totalorder %s20, 3
      %p160 = pnand %p158, %p159
      %p161 = pneg %p160
      // Predicated region
      $region9: #{tpu_custom_call.1} parent=5 // pred_check
        _
      $region10: #{tpu_custom_call.1} parent=5 // pred_check_branch
        %163 = sbr.rel (%p160) target = $region12
      $region11: #{tpu_custom_call.1} parent=5 // pred_region
        %s164 = ssub.s32 %s20, 1
      $region12: #{tpu_custom_call.1} parent=5 // pred_fallthru
        _
      %p165 = scmp.lt.s32.totalorder %s20, 2
      // Predicated region
      $region13: #{tpu_custom_call.1} parent=5 // pred_check
        %p166 = pneg %p165
      $region14: #{tpu_custom_call.1} parent=5 // pred_check_branch
        %168 = sbr.rel (%p166) target = $region16
      $region15: #{tpu_custom_call.1} parent=5 // pred_region
        // Predicated region
        $region17: #{tpu_custom_call.1} parent=15 // pred_check
          %p169 = pneg %p40
        $region18: #{tpu_custom_call.1} parent=15 // pred_check_branch
          %171 = sbr.rel (%p169) target = $region20
        $region19: #{tpu_custom_call.1} parent=15 // pred_region
          %s172 = sand.u32 %s30, 1
          %s173 = scalar_lea.sflag [#allocation3], %s172
          %s174 = sand.u32 %s30, 1
          %s175 = smul.addr %s174, 16
          %s176 = scalar_lea.vmem [#allocation2], %s175
          %s177 = smul.u32 2, %s20
          %s178 = ssub.s32 3, %s177
          %p179 = scmp.lt.s32.totalorder %s178, 2
          %s180 = scalar_select %p179, %s178, 2
          %s181 = smul.u32 128, %s180
          %s183 = ssub.s32 256, %s181
          %184 = vsyncadd %s173, %s183
          %p185 = scmp.ne.s32.totalorder 0, %s181
          %s186 = smul.addr %s177, 128
          %s187 = scalar_lea.hbm %s0, %s186
          %s188 = smul.u32 8, %s180
          %s189 = sshll.u32 %s176, 4
          %s190 = int_to_ptr.vmem [resolvable:$true] %s189
          %s191 = sshll.u32 %s188, 4
          %195 = dma.hbm_to_vmem [thread:$0]  (%p185), %s187, %s191, %s190, %s173, 128, 128, 8
        $region20: #{tpu_custom_call.1} parent=15 // pred_fallthru
          _
        // Predicated region
        $region21: #{tpu_custom_call.1} parent=15 // pred_check
          %p196 = pneg %p66
        $region22: #{tpu_custom_call.1} parent=15 // pred_check_branch
          %198 = sbr.rel (%p196) target = $region24
        $region23: #{tpu_custom_call.1} parent=15 // pred_region
          %s199 = sand.u32 %s20, 1
          %s200 = scalar_lea.sflag [#allocation6], %s199
          %s201 = sand.u32 %s56, 1
          %s202 = smul.addr %s201, 16
          %s203 = scalar_lea.vmem [#allocation5], %s202
          %s204 = smul.u32 2, %s20
          %s205 = ssub.s32 3, %s204
          %p206 = scmp.lt.s32.totalorder %s205, 2
          %s207 = scalar_select %p206, %s205, 2
          %s208 = smul.u32 128, %s207
          %s210 = ssub.s32 256, %s208
          %211 = vsyncadd %s200, %s210
          %p212 = scmp.ne.s32.totalorder 0, %s208
          %s213 = smul.addr %s204, 128
          %s214 = scalar_lea.hbm %s1, %s213
          %s215 = smul.u32 8, %s207
          %s216 = sshll.u32 %s203, 4
          %s217 = int_to_ptr.vmem [resolvable:$true] %s216
          %s218 = sshll.u32 %s215, 4
          %222 = dma.hbm_to_vmem [thread:$0]  (%p212), %s214, %s218, %s217, %s200, 128, 128, 8
        $region24: #{tpu_custom_call.1} parent=15 // pred_fallthru
          _
        // Predicated region
        $region25: #{tpu_custom_call.1} parent=15 // pred_check
          %p223 = pneg %p92
        $region26: #{tpu_custom_call.1} parent=15 // pred_check_branch
          %225 = sbr.rel (%p223) target = $region28
        $region27: #{tpu_custom_call.1} parent=15 // pred_region
          %s226 = sand.u32 %s20, 1
          %s227 = scalar_lea.sflag [#allocation6], %s226
          %s228 = sand.u32 %s82, 1
          %s229 = smul.addr %s228, 16
          %s230 = scalar_lea.vmem [#allocation7], %s229
          %s231 = smul.u32 2, %s20
          %s232 = ssub.s32 3, %s231
          %p233 = scmp.lt.s32.totalorder %s232, 2
          %s234 = scalar_select %p233, %s232, 2
          %s235 = smul.u32 128, %s234
          %s237 = ssub.s32 256, %s235
          %238 = vsyncadd %s227, %s237
          %p239 = scmp.ne.s32.totalorder 0, %s235
          %s240 = smul.addr %s231, 128
          %s241 = scalar_lea.hbm %s2, %s240
          %s242 = smul.u32 8, %s234
          %s243 = sshll.u32 %s230, 4
          %s244 = int_to_ptr.vmem [resolvable:$true] %s243
          %s245 = sshll.u32 %s242, 4
          %249 = dma.hbm_to_vmem [thread:$0]  (%p239), %s241, %s245, %s244, %s227, 128, 128, 8
        $region28: #{tpu_custom_call.1} parent=15 // pred_fallthru
          _
      $region16: #{tpu_custom_call.1} parent=5 // pred_fallthru
        _
      %p250 = scmp.le.s32.totalorder 1, %s20
      %p251 = scmp.lt.s32.totalorder %s20, 3
      %p252 = pnand %p250, %p251
      %p253 = pneg %p252
      // Predicated region
      $region29: #{tpu_custom_call.1} parent=5 // pred_check
        _
      $region30: #{tpu_custom_call.1} parent=5 // pred_check_branch
        %255 = sbr.rel (%p252) target = $region32
      $region31: #{tpu_custom_call.1} parent=5 // pred_region
        %s256 = ssub.s32 %s20, 1
        %s257 = sand.u32 %s33, 1
        %s258 = scalar_lea.sflag [#allocation3], %s257
        %s259 = sand.u32 %s33, 1
        %s260 = smul.addr %s259, 16
        %s261 = scalar_lea.vmem [#allocation2], %s260
        // Predicated region
        $region33: #{tpu_custom_call.1} parent=31 // pred_check
          %p262 = pneg %p46
        $region34: #{tpu_custom_call.1} parent=31 // pred_check_branch
          %264 = sbr.rel (%p262) target = $region36
        $region35: #{tpu_custom_call.1} parent=31 // pred_region
          %265 = dma.done %s258, 256
        $region36: #{tpu_custom_call.1} parent=31 // pred_fallthru
          _
        %s266 = sand.u32 %s25, 1
        %s267 = scalar_lea.sflag [#allocation6], %s266
        %s268 = sand.u32 %s59, 1
        %s269 = smul.addr %s268, 16
        %s270 = scalar_lea.vmem [#allocation5], %s269
        // Predicated region
        $region37: #{tpu_custom_call.1} parent=31 // pred_check
          %p271 = pneg %p72
        $region38: #{tpu_custom_call.1} parent=31 // pred_check_branch
          %273 = sbr.rel (%p271) target = $region40
        $region39: #{tpu_custom_call.1} parent=31 // pred_region
          %274 = dma.done %s267, 256
        $region40: #{tpu_custom_call.1} parent=31 // pred_fallthru
          _
        %s275 = sand.u32 %s25, 1
        %s276 = scalar_lea.sflag [#allocation6], %s275
        %s277 = sand.u32 %s85, 1
        %s278 = smul.addr %s277, 16
        %s279 = scalar_lea.vmem [#allocation7], %s278
        // Predicated region
        $region41: #{tpu_custom_call.1} parent=31 // pred_check
          %p280 = pneg %p98
        $region42: #{tpu_custom_call.1} parent=31 // pred_check_branch
          %282 = sbr.rel (%p280) target = $region44
        $region43: #{tpu_custom_call.1} parent=31 // pred_region
          %283 = dma.done %s276, 256
        $region44: #{tpu_custom_call.1} parent=31 // pred_fallthru
          _
        %s284 = sand.u32 %s33, 1
        %s285 = scalar_lea.sflag [#allocation3], %s284
        %s286 = sand.u32 %s33, 1
        %s287 = smul.addr %s286, 16
        %s288 = scalar_lea.vmem [#allocation2], %s287
        %p289 = pneg %p46
        %p290 = pneg %p43
        %s291 = sand.u32 %s25, 1
        %s292 = scalar_lea.sflag [#allocation6], %s291
        %s293 = sand.u32 %s59, 1
        %s294 = smul.addr %s293, 16
        %s295 = scalar_lea.vmem [#allocation5], %s294
        %p296 = pneg %p72
        %p297 = pneg %p69
        %s298 = sand.u32 %s25, 1
        %s299 = scalar_lea.sflag [#allocation6], %s298
        %s300 = sand.u32 %s85, 1
        %s301 = smul.addr %s300, 16
        %s302 = scalar_lea.vmem [#allocation7], %s301
        %p303 = pneg %p98
        %p304 = pneg %p95
        %p305 = pneg %p124
        %p306 = pneg %p121
        %s307 = sand.u32 %s111, 1
        %s308 = scalar_lea.sflag [#allocation4], %s307
        %s309 = sand.u32 %s111, 1
        %s310 = smul.addr %s309, 16
        %s311 = scalar_lea.vmem [#allocation8], %s310
        %p312 = pneg %p150
        %p313 = pneg %p147
        %s314 = sand.u32 %s137, 1
        %s315 = sand.u32 %s137, 1
        %s316 = smul.addr %s315, 16
        %s317 = scalar_lea.vmem [#allocation9], %s316
        %s318 = smul.u32 2, %s25
        %s319 = ssub.s32 3, %s318
        %p320 = scmp.lt.s32.totalorder %s319, 2
        %s321 = scalar_select %p320, %s319, 2
        %s322 = smul.u32 128, %s321
        %s323 = smul.u32 2, %s25
        %s324 = ssub.s32 3, %s323
        %p325 = scmp.lt.s32.totalorder %s324, 2
        %s326 = scalar_select %p325, %s324, 2
        %s327 = smul.u32 128, %s326
        %s328 = smul.u32 2, %s25
        %s329 = ssub.s32 3, %s328
        %p330 = scmp.lt.s32.totalorder %s329, 2
        %s331 = scalar_select %p330, %s329, 2
        %s332 = smul.u32 128, %s331
        %s333 = smul.u32 2, %s25
        %s334 = ssub.s32 3, %s333
        %p335 = scmp.lt.s32.totalorder %s334, 2
        %s336 = scalar_select %p335, %s334, 2
        %s337 = smul.u32 128, %s336
        %s338 = smul.u32 2, %s25
        %s339 = ssub.s32 3, %s338
        %p340 = scmp.lt.s32.totalorder %s339, 2
        %s341 = scalar_select %p340, %s339, 2
        %s342 = smul.u32 128, %s341
        %v343 = vld [vmem:[%s261] sm:$0xff]
        %v344 = vld [vmem:[%s261 + $0x8] sm:$0xff]
        %v345 = vld [vmem:[%s279] sm:$0xff]
        %v346 = vld [vmem:[%s279 + $0x8] sm:$0xff]
        %v347 = vld [vmem:[%s270] sm:$0xff]
        %v348 = vld [vmem:[%s270 + $0x8] sm:$0xff]
        %v349 = vmul.f32 %v345, 0.5
        %v350 = vmul.f32 %v346, 0.5
        %v351 = vadd.f32 %v343, %v349
        %v352 = vadd.f32 %v344, %v350
        %vm353 = vcmask 261120
        %354 = vst.msk [vmem:[%s311] sm:$0xff] %vm353, %v351
        %355 = vst.msk [vmem:[%s311 + $0x8] sm:$0xff] %vm353, %v352
        %v356 = vsub.f32 %v347, %v343
        %v357 = vsub.f32 %v348, %v344
        %v358 = vmul.f32 %v356, 2.0
        %v359 = vmul.f32 %v357, 2.0
        %v360 = vmul.f32 %v358, %v358
        %v361 = vmul.f32 %v359, %v359
        %v362 = vmul.f32 %v360, -0.5
        %v363 = vmul.f32 %v361, -0.5
        %v364 = vsub.f32 %v362, 0.22579135
        %v365 = vsub.f32 %v363, 0.22579135
        %v366 = vsel %vm353, %v364, 0.0
        %367 = vadd.xlane.f32.xlu0 %v366
        %v368 = vpop.xlane.xlu0 %367
        %v369 = vsel %vm353, %v365, 0.0
        %370 = vadd.xlane.f32.xlu0 %v369
        %v371 = vpop.xlane.xlu0 %370
        %vm372 = vcmask 7168
        %373 = vst.msk [vmem:[%s317] sm:$0xff] %vm372, %v368
        %374 = vst.msk [vmem:[%s317 + $0x8] sm:$0xff] %vm372, %v371
        %s375 = sand.u32 %s111, 1
        %s376 = scalar_lea.sflag [#allocation4], %s375
        %s377 = sand.u32 %s111, 1
        %s378 = smul.addr %s377, 16
        %s379 = scalar_lea.vmem [#allocation8], %s378
        %s380 = sand.u32 %s137, 1
        %s381 = sand.u32 %s137, 1
        %s382 = smul.addr %s381, 16
        %s383 = scalar_lea.vmem [#allocation9], %s382
        // Predicated region
        $region45: #{tpu_custom_call.1} parent=31 // pred_check
          %p384 = pneg %p121
        $region46: #{tpu_custom_call.1} parent=31 // pred_check_branch
          %386 = sbr.rel (%p384) target = $region48
        $region47: #{tpu_custom_call.1} parent=31 // pred_region
          %s387 = smul.u32 2, %s25
          %s388 = ssub.s32 3, %s387
          %p389 = scmp.lt.s32.totalorder %s388, 2
          %s390 = scalar_select %p389, %s388, 2
          %s391 = smul.u32 128, %s390
          %s393 = ssub.s32 256, %s391
          %394 = vsyncadd %s376, %s393
          %p395 = scmp.ne.s32.totalorder 0, %s391
          %s396 = smul.addr %s387, 128
          %s397 = scalar_lea.hbm %s3, %s396
          %s398 = smul.u32 8, %s390
          %s399 = sshll.u32 %s379, 4
          %s400 = int_to_ptr.vmem [resolvable:$true] %s399
          %s401 = sshll.u32 %s398, 4
          %405 = dma.vmem_to_hbm [thread:$0]  (%p395), %s400, %s401, %s397, %s376, 128, 128, 8
        $region48: #{tpu_custom_call.1} parent=31 // pred_fallthru
          _
        // Predicated region
        $region49: #{tpu_custom_call.1} parent=31 // pred_check
          %p406 = pneg %p147
        $region50: #{tpu_custom_call.1} parent=31 // pred_check_branch
          %408 = sbr.rel (%p406) target = $region52
        $region51: #{tpu_custom_call.1} parent=31 // pred_region
          %s409 = smul.u32 2, %s25
          %s410 = ssub.s32 3, %s409
          %p411 = scmp.lt.s32.totalorder %s410, 2
          %s412 = scalar_select %p411, %s410, 2
          %s413 = smul.u32 128, %s412
          %p414 = scmp.ne.s32.totalorder 0, %s413
          %s415 = smul.addr %s409, 8
          %s416 = scalar_lea.vmem %s4, %s415
          // Predicated region
          $region53: #{tpu_custom_call.1} parent=51 // pred_check
            %p417 = pneg %p414
          $region54: #{tpu_custom_call.1} parent=51 // pred_check_branch
            %419 = sbr.rel (%p417) target = $region56
          $region55: #{tpu_custom_call.1} parent=51 // pred_region
            // Predicated region
            $region57: #{tpu_custom_call.1} parent=55 // pred_check
              _
            $region58: #{tpu_custom_call.1} parent=55 // pred_check_branch
              %421 = sbr.rel (0) target = $region60
            $region59: #{tpu_custom_call.1} parent=55 // pred_region
              // Predicated region
              $region79: #{tpu_custom_call.1} parent=59 // pred_check
                _
              $region80: #{tpu_custom_call.1} parent=59 // pred_check_branch
                %472 = sbr.rel (0) target = $region82
              $region81: #{tpu_custom_call.1} parent=59 // pred_region
                %s473 = sshrl.u32 %s412, 1
                // While loop
                $region83: #{tpu_custom_call.1} parent=81 // loop_pre_header
                  _
                $region84: #{tpu_custom_call.1} parent=81 // loop_header
                  %s475 = sphi 0, %s477
                  %p476 = scmp.ge.s32.totalorder %s475, %s473
                  %s480 = sphi 0, %s489
                  %s481 = sphi %s383, %s492
                  %s482 = sphi %s416, %s493
                $region85: #{tpu_custom_call.1} parent=81 // loop_header_branch
                  %479 = sbr.rel (%p476) target = $region89
                $region86: #{tpu_custom_call.1} parent=81 // loop_body
                  %v483 = vld [vmem:[%s481] sm:$0xff]
                  %484 = vst [vmem:[%s482] sm:$0xff] %v483
                  %v485 = vld [vmem:[%s481 + $0x8] sm:$0xff]
                  %486 = vst [vmem:[%s482 + $0x8] sm:$0xff] %v485
                  %s487 = sadd.s32 1, %s480
                  %p488 = scmp.ge.s32.totalorder %s487, %s473
                  %s489 = scalar_select %p488, 0, %s487
                  %s490 = smul.u32 %s489, 16
                  %s491 = smul.u32 %s489, 16
                  %s492 = scalar_lea.vmem %s383, %s490 [#allocation9]
                  %s493 = scalar_lea.vmem %s416, %s491
                $region87: #{tpu_custom_call.1} parent=81 // loop_footer
                  %s477 = sadd.s32 %s475, 1
                $region88: #{tpu_custom_call.1} parent=81 // loop_footer_branch
                  %474 = sbr.rel target = $region84
                $region89: #{tpu_custom_call.1} parent=81 // loop_exit
                  _
                %s494 = sshrl.u32 %s412, 1
                %s495 = sand.u32 %s412, 1
                %s496 = smul.u32 %s494, 2
                %s497 = smul.u32 8, %s496
                %s498 = scalar_lea.vmem %s383, %s497 [#allocation9]
                %s499 = smul.u32 8, %s496
                %s500 = scalar_lea.vmem %s416, %s499
                // While loop
                $region90: #{tpu_custom_call.1} parent=81 // loop_pre_header
                  _
                $region91: #{tpu_custom_call.1} parent=81 // loop_header
                  %s502 = sphi 0, %s504
                  %p503 = scmp.ge.s32.totalorder %s502, %s495
                  %s507 = sphi 0, %s514
                  %s508 = sphi %s498, %s517
                  %s509 = sphi %s500, %s518
                $region92: #{tpu_custom_call.1} parent=81 // loop_header_branch
                  %506 = sbr.rel (%p503) target = $region96
                $region93: #{tpu_custom_call.1} parent=81 // loop_body
                  %v510 = vld [vmem:[%s508] sm:$0xff]
                  %511 = vst [vmem:[%s509] sm:$0xff] %v510
                  %s512 = sadd.s32 1, %s507
                  %p513 = scmp.ge.s32.totalorder %s512, %s495
                  %s514 = scalar_select %p513, 0, %s512
                  %s515 = smul.u32 %s514, 8
                  %s516 = smul.u32 %s514, 8
                  %s517 = scalar_lea.vmem %s498, %s515 [#allocation9]
                  %s518 = scalar_lea.vmem %s500, %s516
                $region94: #{tpu_custom_call.1} parent=81 // loop_footer
                  %s504 = sadd.s32 %s502, 1
                $region95: #{tpu_custom_call.1} parent=81 // loop_footer_branch
                  %501 = sbr.rel target = $region91
                $region96: #{tpu_custom_call.1} parent=81 // loop_exit
                  _
              $region82: #{tpu_custom_call.1} parent=59 // pred_fallthru
                _
              // Predicated region
              $region97: #{tpu_custom_call.1} parent=59 // pred_check
                _
              $region98: #{tpu_custom_call.1} parent=59 // pred_check_branch
                %520 = sbr.rel target = $region100
              $region99: #{tpu_custom_call.1} parent=59 // pred_region
                _
              $region100: #{tpu_custom_call.1} parent=59 // pred_fallthru
                _
            $region60: #{tpu_custom_call.1} parent=55 // pred_fallthru
              _
            // Predicated region
            $region61: #{tpu_custom_call.1} parent=55 // pred_check
              _
            $region62: #{tpu_custom_call.1} parent=55 // pred_check_branch
              %423 = sbr.rel target = $region64
            $region63: #{tpu_custom_call.1} parent=55 // pred_region
              %s425 = sshrl.u32 %s412, 1
              // While loop
              $region65: #{tpu_custom_call.1} parent=63 // loop_pre_header
                _
              $region66: #{tpu_custom_call.1} parent=63 // loop_header
                %s427 = sphi 0, %s429
                %p428 = scmp.ge.s32.totalorder %s427, %s425
                %s432 = sphi 0, %s441
                %s433 = sphi %s383, %s444
                %s434 = sphi %s416, %s445
              $region67: #{tpu_custom_call.1} parent=63 // loop_header_branch
                %431 = sbr.rel (%p428) target = $region71
              $region68: #{tpu_custom_call.1} parent=63 // loop_body
                %v435 = vld [vmem:[%s433] sm:$0xff]
                %436 = vst [vmem:[%s434] sm:$0xff] %v435
                %v437 = vld [vmem:[%s433 + $0x8] sm:$0xff]
                %438 = vst [vmem:[%s434 + $0x8] sm:$0xff] %v437
                %s439 = sadd.s32 1, %s432
                %p440 = scmp.ge.s32.totalorder %s439, %s425
                %s441 = scalar_select %p440, 0, %s439
                %s442 = smul.u32 %s441, 16
                %s443 = smul.u32 %s441, 16
                %s444 = scalar_lea.vmem %s383, %s442 [#allocation9]
                %s445 = scalar_lea.vmem %s416, %s443
              $region69: #{tpu_custom_call.1} parent=63 // loop_footer
                %s429 = sadd.s32 %s427, 1
              $region70: #{tpu_custom_call.1} parent=63 // loop_footer_branch
                %426 = sbr.rel target = $region66
              $region71: #{tpu_custom_call.1} parent=63 // loop_exit
                _
              %s446 = sshrl.u32 %s412, 1
              %s447 = sand.u32 %s412, 1
              %s448 = smul.u32 %s446, 2
              %s449 = smul.u32 8, %s448
              %s450 = scalar_lea.vmem %s383, %s449 [#allocation9]
              %s451 = smul.u32 8, %s448
              %s452 = scalar_lea.vmem %s416, %s451
              // While loop
              $region72: #{tpu_custom_call.1} parent=63 // loop_pre_header
                _
              $region73: #{tpu_custom_call.1} parent=63 // loop_header
                %s454 = sphi 0, %s456
                %p455 = scmp.ge.s32.totalorder %s454, %s447
                %s459 = sphi 0, %s466
                %s460 = sphi %s450, %s469
                %s461 = sphi %s452, %s470
              $region74: #{tpu_custom_call.1} parent=63 // loop_header_branch
                %458 = sbr.rel (%p455) target = $region78
              $region75: #{tpu_custom_call.1} parent=63 // loop_body
                %v462 = vld [vmem:[%s460] sm:$0xff]
                %463 = vst [vmem:[%s461] sm:$0xff] %v462
                %s464 = sadd.s32 1, %s459
                %p465 = scmp.ge.s32.totalorder %s464, %s447
                %s466 = scalar_select %p465, 0, %s464
                %s467 = smul.u32 %s466, 8
                %s468 = smul.u32 %s466, 8
                %s469 = scalar_lea.vmem %s450, %s467 [#allocation9]
                %s470 = scalar_lea.vmem %s452, %s468
              $region76: #{tpu_custom_call.1} parent=63 // loop_footer
                %s456 = sadd.s32 %s454, 1
              $region77: #{tpu_custom_call.1} parent=63 // loop_footer_branch
                %453 = sbr.rel target = $region73
              $region78: #{tpu_custom_call.1} parent=63 // loop_exit
                _
            $region64: #{tpu_custom_call.1} parent=55 // pred_fallthru
              _
          $region56: #{tpu_custom_call.1} parent=51 // pred_fallthru
            _
          %521 = vnop
        $region52: #{tpu_custom_call.1} parent=31 // pred_fallthru
          _
      $region32: #{tpu_custom_call.1} parent=5 // pred_fallthru
        _
      %p522 = scmp.le.s32.totalorder 2, %s20
      // Predicated region
      $region101: #{tpu_custom_call.1} parent=5 // pred_check
        %p523 = pneg %p522
      $region102: #{tpu_custom_call.1} parent=5 // pred_check_branch
        %525 = sbr.rel (%p523) target = $region104
      $region103: #{tpu_custom_call.1} parent=5 // pred_region
        %s526 = ssub.s32 %s20, 2
        // Predicated region
        $region105: #{tpu_custom_call.1} parent=103 // pred_check
          %p527 = pneg %p127
        $region106: #{tpu_custom_call.1} parent=103 // pred_check_branch
          %529 = sbr.rel (%p527) target = $region108
        $region107: #{tpu_custom_call.1} parent=103 // pred_region
          %s530 = sand.u32 %s112, 1
          %s531 = scalar_lea.sflag [#allocation4], %s530
          %s532 = sand.u32 %s112, 1
          %s533 = smul.addr %s532, 16
          %s534 = scalar_lea.vmem [#allocation8], %s533
          %535 = dma.done %s531, 256
        $region108: #{tpu_custom_call.1} parent=103 // pred_fallthru
          _
        // Predicated region
        $region109: #{tpu_custom_call.1} parent=103 // pred_check
          %p536 = pneg %p153
        $region110: #{tpu_custom_call.1} parent=103 // pred_check_branch
          %538 = sbr.rel (%p536) target = $region112
        $region111: #{tpu_custom_call.1} parent=103 // pred_region
          %s539 = sand.u32 %s138, 1
          %s540 = sand.u32 %s138, 1
          %s541 = smul.addr %s540, 16
          %s542 = scalar_lea.vmem [#allocation9], %s541
        $region112: #{tpu_custom_call.1} parent=103 // pred_fallthru
          _
      $region104: #{tpu_custom_call.1} parent=5 // pred_fallthru
        _
    $region6: #{tpu_custom_call.1} parent=1 // loop_footer
      %s24 = sadd.s32 1, %s20
    $region7: #{tpu_custom_call.1} parent=1 // loop_footer_branch
      %19 = sbr.rel target = $region3
    $region8: #{tpu_custom_call.1} parent=1 // loop_exit
      _
    %543 = vsyncpa [#allocation3], 1
    %s544 = scalar_lea.sflag [#allocation3], 1
    %545 = vsyncpa %s544, 1
    %546 = vsyncpa [#allocation6], 1
    %s547 = scalar_lea.sflag [#allocation6], 1
    %548 = vsyncpa %s547, 1
    %549 = vsyncpa [#allocation4], 1
    %s550 = scalar_lea.sflag [#allocation4], 1
    %551 = vsyncpa %s550, 1

</llo_original>
